<compile_context>
chip_gen: v5e
topology: v5e:2x2
jax: 0.10.0
libtpu: 0.0.40
codegen_flags: <defaults>
</compile_context>

<pallas_src>
import jax
import jax.numpy as jnp
from jax import lax
from jax.experimental import pallas as pl
from jax.experimental.pallas import tpu as pltpu


# ----------------------------- Pallas kernel ------------------------------- #
def _critic_kernel(obs_ref,                       # (TB, obs_dim) f32
                   w1_ref, b1_ref,                # (32, obs_dim) bf16, (32, 1) f32
                   w2_ref, b2_ref,                # (64, 32)      bf16, (64, 1) f32
                   w3_ref, b3_ref,                # (32, 64)      bf16, (32, 1) f32
                   w4_ref, b4_ref,                # (1, 32)       bf16, (1, 1)  f32
                   out_ref):                      # (1, TB)       f32
    """Fused 4-layer MLP with batch on the lane axis.

    obs comes in natively as (TB, obs_dim) f32; we cast to bf16 in-kernel and
    contract layer 1 on obs's last dim so the result is already (32, TB).
    All dots take bf16 operands with f32 accumulation; bias-add/ReLU are f32.
    """
    x = obs_ref[...].astype(jnp.bfloat16)                     # (TB, obs_dim) bf16

    # Layer 1: W1(32,D) contracted with obs(TB,D) on D -> (32, TB).
    h = lax.dot_general(w1_ref[...], x,
                        dimension_numbers=(((1,), (1,)), ((), ())),
                        preferred_element_type=jnp.float32)
    h = jnp.maximum(h + b1_ref[...], 0.0)                     # (32, TB) f32

    h = jnp.dot(w2_ref[...], h.astype(jnp.bfloat16),
                preferred_element_type=jnp.float32)
    h = jnp.maximum(h + b2_ref[...], 0.0)                     # (64, TB) f32

    h = jnp.dot(w3_ref[...], h.astype(jnp.bfloat16),
                preferred_element_type=jnp.float32)
    h = jnp.maximum(h + b3_ref[...], 0.0)                     # (32, TB) f32

    v = jnp.dot(w4_ref[...], h.astype(jnp.bfloat16),
                preferred_element_type=jnp.float32)
    out_ref[...] = v + b4_ref[...]                            # (1, TB) f32


# ------------------------------- wrapper ------------------------------------ #
def _choose_block_batch(B):
    """Lane-aligned batch tile.  Prefer >= 4 grid steps (v7x: >= 2 per TC after
    megacore sharding, keeps DMA/compute pipelining), fall back to >= 2 steps,
    then to a single padded 128 tile for tiny batches."""
    candidates = (4096, 2048, 1024, 512, 256, 128)
    for min_steps in (4, 2):
        for cand in candidates:
            if B >= min_steps * cand:
                return cand
    return 128


def critic_forward(obs, params, *, block_batch=None):
    """Run the Critic MLP with a single fused Pallas kernel.

    obs:    (B, obs_dim) float32
    params: dict with w1..w4 as (out,in) (f32 or pre-cast bf16) and b1..b4 as (out,1)
    returns (B,) float32  (matches torch.squeeze(..., -1))
    """
    B, obs_dim = obs.shape
    if block_batch is None:
        block_batch = _choose_block_batch(B)
    assert block_batch % 128 == 0, "block_batch must be a multiple of 128"

    # Pad batch up to a block multiple (keeps lane-dense tiles for any B).
    pad = (-B) % block_batch
    obs_p = jnp.pad(obs, ((0, pad), (0, 0))) if pad else obs
    Bp = B + pad

    def _bf16(w):
        return w if w.dtype == jnp.bfloat16 else w.astype(jnp.bfloat16)

    w1, w2 = _bf16(params["w1"]), _bf16(params["w2"])
    w3, w4 = _bf16(params["w3"]), _bf16(params["w4"])
    b1 = params["b1"].astype(jnp.float32)
    b2 = params["b2"].astype(jnp.float32)
    b3 = params["b3"].astype(jnp.float32)
    b4 = params["b4"].astype(jnp.float32)

    def _const(arr):
        # Full (tiny) tensor replicated to every grid step.
        return pl.BlockSpec(arr.shape, lambda i: (0, 0))

    grid = (Bp // block_batch,)

    out = pl.pallas_call(
        _critic_kernel,
        out_shape=jax.ShapeDtypeStruct((1, Bp), jnp.float32),
        grid_spec=pltpu.PrefetchScalarGridSpec(
            num_scalar_prefetch=0,
            grid=grid,
            in_specs=[
                pl.BlockSpec((block_batch, obs_dim), lambda i: (i, 0)),  # obs tile
                _const(w1), _const(b1),
                _const(w2), _const(b2),
                _const(w3), _const(b3),
                _const(w4), _const(b4),
            ],
            out_specs=pl.BlockSpec((1, block_batch), lambda i: (0, i)),  # lane-dense
        ),
        compiler_params=pltpu.CompilerParams(
            dimension_semantics=("parallel",),       # batch tiles shard across TCs (v7x)
            vmem_limit_bytes=32 * 1024 * 1024,       # v7x-safe (64 MiB physical VMEM)
        ),
    )(obs_p, w1, b1, w2, b2, w3, b3, w4, b4)

    return out[0, :B]                                          # (B,), squeeze(-1)


# --------------------------- parameter creation ----------------------------- #
def init_critic_params(key, obs_dim):
    """Deterministic init mimicking PyTorch nn.Linear default:
    U(-1/sqrt(fan_in), 1/sqrt(fan_in)) for both weight and bias.
    Weights stored PyTorch-style as (out_features, in_features); biases (out, 1)."""
    dims = [(32, obs_dim), (64, 32), (32, 64), (1, 32)]      # (out, in)
    params = {}
    for idx, (fan_out, fan_in) in enumerate(dims, start=1):
        key, kw, kb = jax.random.split(key, 3)
        bound = 1.0 / jnp.sqrt(jnp.float32(fan_in))
        params[f"w{idx}"] = jax.random.uniform(
            kw, (fan_out, fan_in), jnp.float32, minval=-bound, maxval=bound)
        params[f"b{idx}"] = jax.random.uniform(
            kb, (fan_out, 1), jnp.float32, minval=-bound, maxval=bound)
    return params


def precast_weights(params):
    """One-time bf16 cast of the weight matrices (removes per-call converts)."""
    out = dict(params)
    for n in ("w1", "w2", "w3", "w4"):
        out[n] = params[n].astype(jnp.bfloat16)
    return out


# ------------------------------ reference ----------------------------------- #
def critic_forward_ref(obs, params):
    h = jnp.maximum(obs @ params["w1"].T + params["b1"].T, 0.0)
    h = jnp.maximum(h @ params["w2"].T + params["b2"].T, 0.0)
    h = jnp.maximum(h @ params["w3"].T + params["b3"].T, 0.0)
    v = h @ params["w4"].T + params["b4"].T
    return jnp.squeeze(v, axis=-1)


# --------------------------------- main -------------------------------------- #
if __name__ == "__main__":
    key = jax.random.PRNGKey(0)
    key, kp, kx = jax.random.split(key, 3)

    OBS_DIM = 16
    BATCH = 256              # 2 grid steps of 128 (lane-aligned)

    params = init_critic_params(kp, OBS_DIM)
    run_params = precast_weights(params)          # bf16 weights cast once

    obs = jax.random.normal(kx, (BATCH, OBS_DIM), jnp.float32)

    fwd = jax.jit(critic_forward)
    values = fwd(obs, run_params)
    jax.block_until_ready(values)

    ref = critic_forward_ref(obs, params)
    assert values.shape == (BATCH,), values.shape
    # bf16 matmul operands (f32 accumulation) -> relaxed tolerance
    assert jnp.allclose(values, ref, atol=2e-2, rtol=2e-2), (
        float(jnp.max(jnp.abs(values - ref))))

    # Ragged batch exercises the zero-pad + output-slice path.
    obs2 = jax.random.normal(jax.random.PRNGKey(1), (200, OBS_DIM), jnp.float32)
    values2 = jax.jit(critic_forward)(obs2, run_params)
    jax.block_until_ready(values2)
    ref2 = critic_forward_ref(obs2, params)
    assert values2.shape == (200,), values2.shape
    assert jnp.allclose(values2, ref2, atol=2e-2, rtol=2e-2), (
        float(jnp.max(jnp.abs(values2 - ref2))))

    print("KERNEL_OK")
</pallas_src>

<mosaic_0001>
module attributes {stable_mosaic.version = 11 : i64} {
  func.func @_critic_kernel(%arg0: i32, %arg1: memref<128x16xf32, #tpu.memory_space<vmem>>, %arg2: memref<32x16xbf16, #tpu.memory_space<vmem>>, %arg3: memref<32x1xf32, #tpu.memory_space<vmem>>, %arg4: memref<64x32xbf16, #tpu.memory_space<vmem>>, %arg5: memref<64x1xf32, #tpu.memory_space<vmem>>, %arg6: memref<32x64xbf16, #tpu.memory_space<vmem>>, %arg7: memref<32x1xf32, #tpu.memory_space<vmem>>, %arg8: memref<1x32xbf16, #tpu.memory_space<vmem>>, %arg9: memref<1x1xf32, #tpu.memory_space<vmem>>, %arg10: memref<1x128xf32, #tpu.memory_space<vmem>>) attributes {dimension_semantics = [#tpu.dimension_semantics<parallel>], iteration_bounds = array<i64: 2>, scalar_prefetch = 0 : i64, scratch_operands = 0 : i64, tpu.core_type = #tpu.core_type<tc>, window_params = [{transform_indices = @transform_0, window_bounds = array<i64: 128, 16>}, {pipeline_mode = #tpu.pipeline_mode<synchronous>, transform_indices = @transform_1, window_bounds = array<i64: 32, 16>}, {pipeline_mode = #tpu.pipeline_mode<synchronous>, transform_indices = @transform_2, window_bounds = array<i64: 32, 1>}, {pipeline_mode = #tpu.pipeline_mode<synchronous>, transform_indices = @transform_3, window_bounds = array<i64: 64, 32>}, {pipeline_mode = #tpu.pipeline_mode<synchronous>, transform_indices = @transform_4, window_bounds = array<i64: 64, 1>}, {pipeline_mode = #tpu.pipeline_mode<synchronous>, transform_indices = @transform_5, window_bounds = array<i64: 32, 64>}, {pipeline_mode = #tpu.pipeline_mode<synchronous>, transform_indices = @transform_6, window_bounds = array<i64: 32, 1>}, {pipeline_mode = #tpu.pipeline_mode<synchronous>, transform_indices = @transform_7, window_bounds = array<i64: 1, 32>}, {pipeline_mode = #tpu.pipeline_mode<synchronous>, transform_indices = @transform_8, window_bounds = array<i64: 1, 1>}, {transform_indices = @transform_9, window_bounds = array<i64: 1, 128>}]} {
    %c0 = arith.constant 0 : index
    %c0_0 = arith.constant 0 : index
    %0 = vector.load %arg1[%c0, %c0_0] : memref<128x16xf32, #tpu.memory_space<vmem>>, vector<128x16xf32>
    %1 = arith.truncf %0 : vector<128x16xf32> to vector<128x16xbf16>
    %c0_1 = arith.constant 0 : index
    %c0_2 = arith.constant 0 : index
    %2 = vector.load %arg2[%c0_1, %c0_2] : memref<32x16xbf16, #tpu.memory_space<vmem>>, vector<32x16xbf16>
    %cst = arith.constant dense<0.000000e+00> : vector<32x128xf32>
    %3 = tpu.matmul %2, %1, %cst {dimension_numbers = #tpu.dot_dimension_numbers<[1], [1], [0], [0], [0, 0, 1, 0], [], []>} : vector<32x16xbf16>, vector<128x16xbf16>, vector<32x128xf32> -> vector<32x128xf32>
    %c0_3 = arith.constant 0 : index
    %c0_4 = arith.constant 0 : index
    %4 = vector.load %arg3[%c0_3, %c0_4] : memref<32x1xf32, #tpu.memory_space<vmem>>, vector<32x1xf32>
    %5 = vector.broadcast %4 : vector<32x1xf32> to vector<32x128xf32>
    %6 = arith.addf %3, %5 : vector<32x128xf32>
    %cst_5 = arith.constant 0.000000e+00 : f32
    %7 = vector.broadcast %cst_5 : f32 to vector<32x128xf32>
    %8 = arith.maximumf %6, %7 : vector<32x128xf32>
    %c0_6 = arith.constant 0 : index
    %c0_7 = arith.constant 0 : index
    %9 = vector.load %arg4[%c0_6, %c0_7] : memref<64x32xbf16, #tpu.memory_space<vmem>>, vector<64x32xbf16>
    %10 = arith.truncf %8 : vector<32x128xf32> to vector<32x128xbf16>
    %cst_8 = arith.constant dense<0.000000e+00> : vector<64x128xf32>
    %11 = tpu.matmul %9, %10, %cst_8 {dimension_numbers = #tpu.dot_dimension_numbers<[1], [0], [0], [1], [0, 0, 1, 1], [], []>} : vector<64x32xbf16>, vector<32x128xbf16>, vector<64x128xf32> -> vector<64x128xf32>
    %c0_9 = arith.constant 0 : index
    %c0_10 = arith.constant 0 : index
    %12 = vector.load %arg5[%c0_9, %c0_10] : memref<64x1xf32, #tpu.memory_space<vmem>>, vector<64x1xf32>
    %13 = vector.broadcast %12 : vector<64x1xf32> to vector<64x128xf32>
    %14 = arith.addf %11, %13 : vector<64x128xf32>
    %cst_11 = arith.constant 0.000000e+00 : f32
    %15 = vector.broadcast %cst_11 : f32 to vector<64x128xf32>
    %16 = arith.maximumf %14, %15 : vector<64x128xf32>
    %c0_12 = arith.constant 0 : index
    %c0_13 = arith.constant 0 : index
    %17 = vector.load %arg6[%c0_12, %c0_13] : memref<32x64xbf16, #tpu.memory_space<vmem>>, vector<32x64xbf16>
    %18 = arith.truncf %16 : vector<64x128xf32> to vector<64x128xbf16>
    %cst_14 = arith.constant dense<0.000000e+00> : vector<32x128xf32>
    %19 = tpu.matmul %17, %18, %cst_14 {dimension_numbers = #tpu.dot_dimension_numbers<[1], [0], [0], [1], [0, 0, 1, 1], [], []>} : vector<32x64xbf16>, vector<64x128xbf16>, vector<32x128xf32> -> vector<32x128xf32>
    %c0_15 = arith.constant 0 : index
    %c0_16 = arith.constant 0 : index
    %20 = vector.load %arg7[%c0_15, %c0_16] : memref<32x1xf32, #tpu.memory_space<vmem>>, vector<32x1xf32>
    %21 = vector.broadcast %20 : vector<32x1xf32> to vector<32x128xf32>
    %22 = arith.addf %19, %21 : vector<32x128xf32>
    %cst_17 = arith.constant 0.000000e+00 : f32
    %23 = vector.broadcast %cst_17 : f32 to vector<32x128xf32>
    %24 = arith.maximumf %22, %23 : vector<32x128xf32>
    %c0_18 = arith.constant 0 : index
    %c0_19 = arith.constant 0 : index
    %25 = vector.load %arg8[%c0_18, %c0_19] : memref<1x32xbf16, #tpu.memory_space<vmem>>, vector<1x32xbf16>
    %26 = arith.truncf %24 : vector<32x128xf32> to vector<32x128xbf16>
    %cst_20 = arith.constant dense<0.000000e+00> : vector<1x128xf32>
    %27 = tpu.matmul %25, %26, %cst_20 {dimension_numbers = #tpu.dot_dimension_numbers<[1], [0], [0], [1], [0, 0, 1, 1], [], []>} : vector<1x32xbf16>, vector<32x128xbf16>, vector<1x128xf32> -> vector<1x128xf32>
    %c0_21 = arith.constant 0 : index
    %c0_22 = arith.constant 0 : index
    %28 = vector.load %arg9[%c0_21, %c0_22] : memref<1x1xf32, #tpu.memory_space<vmem>>, vector<1x1xf32>
    %29 = vector.broadcast %28 : vector<1x1xf32> to vector<1x128xf32>
    %30 = arith.addf %27, %29 : vector<1x128xf32>
    %c0_23 = arith.constant 0 : index
    %c0_24 = arith.constant 0 : index
    %31 = vector.load %arg10[%c0_23, %c0_24] : memref<1x128xf32, #tpu.memory_space<vmem>>, vector<1x128xf32>
    tpu.vector_store %arg10[%c0_23, %c0_24], %30 {strides = array<i32>} : memref<1x128xf32, #tpu.memory_space<vmem>>, vector<1x128xf32>,
    return
  }
  func.func @transform_0(%arg0: i32) -> (i32, i32) {
    %c0_i32 = arith.constant 0 : i32
    %c0_i32_0 = arith.constant 0 : i32
    return %arg0, %c0_i32 : i32, i32
  }
  func.func @transform_1(%arg0: i32) -> (i32, i32) {
    %c0_i32 = arith.constant 0 : i32
    %c0_i32_0 = arith.constant 0 : i32
    %c0_i32_1 = arith.constant 0 : i32
    return %c0_i32, %c0_i32_0 : i32, i32
  }
  func.func @transform_2(%arg0: i32) -> (i32, i32) {
    %c0_i32 = arith.constant 0 : i32
    %c0_i32_0 = arith.constant 0 : i32
    %c0_i32_1 = arith.constant 0 : i32
    return %c0_i32, %c0_i32_0 : i32, i32
  }
  func.func @transform_3(%arg0: i32) -> (i32, i32) {
    %c0_i32 = arith.constant 0 : i32
    %c0_i32_0 = arith.constant 0 : i32
    %c0_i32_1 = arith.constant 0 : i32
    return %c0_i32, %c0_i32_0 : i32, i32
  }
  func.func @transform_4(%arg0: i32) -> (i32, i32) {
    %c0_i32 = arith.constant 0 : i32
    %c0_i32_0 = arith.constant 0 : i32
    %c0_i32_1 = arith.constant 0 : i32
    return %c0_i32, %c0_i32_0 : i32, i32
  }
  func.func @transform_5(%arg0: i32) -> (i32, i32) {
    %c0_i32 = arith.constant 0 : i32
    %c0_i32_0 = arith.constant 0 : i32
    %c0_i32_1 = arith.constant 0 : i32
    return %c0_i32, %c0_i32_0 : i32, i32
  }
  func.func @transform_6(%arg0: i32) -> (i32, i32) {
    %c0_i32 = arith.constant 0 : i32
    %c0_i32_0 = arith.constant 0 : i32
    %c0_i32_1 = arith.constant 0 : i32
    return %c0_i32, %c0_i32_0 : i32, i32
  }
  func.func @transform_7(%arg0: i32) -> (i32, i32) {
    %c0_i32 = arith.constant 0 : i32
    %c0_i32_0 = arith.constant 0 : i32
    %c0_i32_1 = arith.constant 0 : i32
    return %c0_i32, %c0_i32_0 : i32, i32
  }
  func.func @transform_8(%arg0: i32) -> (i32, i32) {
    %c0_i32 = arith.constant 0 : i32
    %c0_i32_0 = arith.constant 0 : i32
    %c0_i32_1 = arith.constant 0 : i32
    return %c0_i32, %c0_i32_0 : i32, i32
  }
  func.func @transform_9(%arg0: i32) -> (i32, i32) {
    %c0_i32 = arith.constant 0 : i32
    %c0_i32_0 = arith.constant 0 : i32
    return %c0_i32, %arg0 : i32, i32
  }
}

</mosaic_0001>

<llo_original>
// kernel: critic_forward.1
$region0: #{critic_forward.1}
  #allocation0 [shape = 'u32[]', space=smem, size = 0x4, offset = 0x4, fixed_abs, tag = 'smem constant byte address 0x4 - core index']
  #allocation1 [shape = 'u32[72,128]{1,0:T(1,128)}', space=vmem, size = 0x9000, scoped, tag = 'internal scratch']
  #allocation2 [shape = 'f32[1,1]{1,0:T(1,128)S(1)}', space=vmem, size = 0x200, scoped, tag = 'scoped memory for critic_forward.1']
  %s0 = inlined_call_operand.vmem [shape: f32[256,16], index: 0, kind: input, shape index: {}]
  %s1 = inlined_call_operand.vmem [shape: bf16[32,16], index: 1, kind: input, shape index: {}]
  %s2 = inlined_call_operand.vmem [shape: f32[32,1], index: 2, kind: input, shape index: {}]
  %s3 = inlined_call_operand.vmem [shape: bf16[64,32], index: 3, kind: input, shape index: {}]
  %s4 = inlined_call_operand.vmem [shape: f32[64,1], index: 4, kind: input, shape index: {}]
  %s5 = inlined_call_operand.vmem [shape: bf16[32,64], index: 5, kind: input, shape index: {}]
  %s6 = inlined_call_operand.vmem [shape: f32[32,1], index: 6, kind: input, shape index: {}]
  %s7 = inlined_call_operand.vmem [shape: bf16[1,32], index: 7, kind: input, shape index: {}]
  %s8 = inlined_call_operand.<no memory space> [shape: f32[1,1], index: 8, kind: input, shape index: {}]
  %s9 = inlined_call_operand.hbm [shape: f32[1,256], index: 9, kind: output, shape index: {}]
  %s10 = sld [smem:[#allocation0]]
  $region69: #{critic_forward.1} parent=0
    _
  %s12 = ssub.s32 1, %s10
  %s13 = scalar_select 0, %s12, %s10
  %v14 = vstv %s8
  %15 = vst [vmem:[#allocation2] sm:$0x1] %v14
  $region1: #{critic_forward.1} parent=0
    #allocation3 [shape = 'u8[1024]{0}', space=vmem, size = 0x400, scoped, tag = 'output window, operand 0']
    #allocation4 [shape = 's32[2]{0}', space=sflag, size = 0x8, scoped, tag = 'scoped memory for critic_forward.1']
    %16 = vsyncpa [#allocation4], 0
    %s17 = scalar_lea.sflag [#allocation4], 1
    %18 = vsyncpa %s17, 0
    loop: start=0, step=1, limit=4
    $region2: #{critic_forward.1} parent=1 // loop_pre_header
      _
    $region3: #{critic_forward.1} parent=1 // loop_header
      %s20 = sphi 0, %s24
      %p21 = scmp.ge.s32.totalorder %s20, 4
      %s30 = sphi 0, %s32
      %s33 = sphi 0, %s30
      %s34 = sphi 0, %s33
      %s50 = sphi 0, %s34
      %s54 = sphi 0, %s54
      %s56 = sphi 0, %s54
      %s57 = sphi 0, %s56
      %s71 = sphi 0, %s57
      %s75 = sphi 0, %s75
      %s77 = sphi 0, %s75
      %s78 = sphi 0, %s77
      %s92 = sphi 0, %s78
      %s96 = sphi 0, %s96
      %s98 = sphi 0, %s96
      %s99 = sphi 0, %s98
      %s113 = sphi 0, %s99
      %s117 = sphi 0, %s117
      %s119 = sphi 0, %s117
      %s120 = sphi 0, %s119
      %s134 = sphi 0, %s120
      %s138 = sphi 0, %s138
      %s140 = sphi 0, %s138
      %s141 = sphi 0, %s140
      %s155 = sphi 0, %s141
      %s159 = sphi 0, %s159
      %s161 = sphi 0, %s159
      %s162 = sphi 0, %s161
      %s176 = sphi 0, %s162
      %s180 = sphi 0, %s180
      %s182 = sphi 0, %s180
      %s183 = sphi 0, %s182
      %s197 = sphi 0, %s183
      %s201 = sphi 0, %s201
      %s203 = sphi 0, %s201
      %s204 = sphi 0, %s203
      %s218 = sphi 0, %s204
      %s224 = sphi 0, %s226
      %s227 = sphi 0, %s224
      %s228 = sphi 0, %s227
      %s244 = sphi 0, %s228
    $region4: #{critic_forward.1} parent=1 // loop_header_branch
      %23 = sbr.rel (%p21) target = $region8
    $region5: #{critic_forward.1} parent=1 // loop_body
      %s25 = ssub.s32 %s20, 1
      %s26 = ssub.s32 %s20, 2
      %s27 = sadd.s32 %s20, 1
      %s28 = ssub.s32 %s20, %s27
      %p29 = scmp.eq.s32.totalorder %s28, 0
      %s31 = sadd.s32 %s30, 1
      %s32 = scalar_select %p29, %s30, %s31
      %p35 = pneg %p29
      %p36 = scmp.eq.s32.totalorder %s20, 1
      %p37 = por %p35, %p36
      %p38 = scmp.ne.s32.totalorder %s30, %s33
      %p39 = scmp.eq.s32.totalorder %s20, 0
      %p40 = por %p38, %p39
      %p41 = scmp.ne.s32.totalorder %s30, %s33
      %p42 = scmp.eq.s32.totalorder %s25, 1
      %p43 = por %p41, %p42
      %p44 = scmp.ne.s32.totalorder %s33, %s34
      %p45 = scmp.eq.s32.totalorder %s25, 0
      %p46 = por %p44, %p45
      %p47 = scmp.ne.s32.totalorder %s33, %s34
      %p48 = scmp.eq.s32.totalorder %s26, 1
      %p49 = por %p47, %p48
      %p51 = scmp.ne.s32.totalorder %s34, %s50
      %p52 = scmp.eq.s32.totalorder %s26, 0
      %p53 = por %p51, %p52
      %s55 = sadd.s32 %s54, 1
      %p58 = scmp.eq.s32.totalorder %s20, 1
      %p59 = scmp.ne.s32.totalorder %s54, %s56
      %p60 = scmp.eq.s32.totalorder %s20, 0
      %p61 = por %p59, %p60
      %p62 = scmp.ne.s32.totalorder %s54, %s56
      %p63 = scmp.eq.s32.totalorder %s25, 1
      %p64 = por %p62, %p63
      %p65 = scmp.ne.s32.totalorder %s56, %s57
      %p66 = scmp.eq.s32.totalorder %s25, 0
      %p67 = por %p65, %p66
      %p68 = scmp.ne.s32.totalorder %s56, %s57
      %p69 = scmp.eq.s32.totalorder %s26, 1
      %p70 = por %p68, %p69
      %p72 = scmp.ne.s32.totalorder %s57, %s71
      %p73 = scmp.eq.s32.totalorder %s26, 0
      %p74 = por %p72, %p73
      %s76 = sadd.s32 %s75, 1
      %p79 = scmp.eq.s32.totalorder %s20, 1
      %p80 = scmp.ne.s32.totalorder %s75, %s77
      %p81 = scmp.eq.s32.totalorder %s20, 0
      %p82 = por %p80, %p81
      %p83 = scmp.ne.s32.totalorder %s75, %s77
      %p84 = scmp.eq.s32.totalorder %s25, 1
      %p85 = por %p83, %p84
      %p86 = scmp.ne.s32.totalorder %s77, %s78
      %p87 = scmp.eq.s32.totalorder %s25, 0
      %p88 = por %p86, %p87
      %p89 = scmp.ne.s32.totalorder %s77, %s78
      %p90 = scmp.eq.s32.totalorder %s26, 1
      %p91 = por %p89, %p90
      %p93 = scmp.ne.s32.totalorder %s78, %s92
      %p94 = scmp.eq.s32.totalorder %s26, 0
      %p95 = por %p93, %p94
      %s97 = sadd.s32 %s96, 1
      %p100 = scmp.eq.s32.totalorder %s20, 1
      %p101 = scmp.ne.s32.totalorder %s96, %s98
      %p102 = scmp.eq.s32.totalorder %s20, 0
      %p103 = por %p101, %p102
      %p104 = scmp.ne.s32.totalorder %s96, %s98
      %p105 = scmp.eq.s32.totalorder %s25, 1
      %p106 = por %p104, %p105
      %p107 = scmp.ne.s32.totalorder %s98, %s99
      %p108 = scmp.eq.s32.totalorder %s25, 0
      %p109 = por %p107, %p108
      %p110 = scmp.ne.s32.totalorder %s98, %s99
      %p111 = scmp.eq.s32.totalorder %s26, 1
      %p112 = por %p110, %p111
      %p114 = scmp.ne.s32.totalorder %s99, %s113
      %p115 = scmp.eq.s32.totalorder %s26, 0
      %p116 = por %p114, %p115
      %s118 = sadd.s32 %s117, 1
      %p121 = scmp.eq.s32.totalorder %s20, 1
      %p122 = scmp.ne.s32.totalorder %s117, %s119
      %p123 = scmp.eq.s32.totalorder %s20, 0
      %p124 = por %p122, %p123
      %p125 = scmp.ne.s32.totalorder %s117, %s119
      %p126 = scmp.eq.s32.totalorder %s25, 1
      %p127 = por %p125, %p126
      %p128 = scmp.ne.s32.totalorder %s119, %s120
      %p129 = scmp.eq.s32.totalorder %s25, 0
      %p130 = por %p128, %p129
      %p131 = scmp.ne.s32.totalorder %s119, %s120
      %p132 = scmp.eq.s32.totalorder %s26, 1
      %p133 = por %p131, %p132
      %p135 = scmp.ne.s32.totalorder %s120, %s134
      %p136 = scmp.eq.s32.totalorder %s26, 0
      %p137 = por %p135, %p136
      %s139 = sadd.s32 %s138, 1
      %p142 = scmp.eq.s32.totalorder %s20, 1
      %p143 = scmp.ne.s32.totalorder %s138, %s140
      %p144 = scmp.eq.s32.totalorder %s20, 0
      %p145 = por %p143, %p144
      %p146 = scmp.ne.s32.totalorder %s138, %s140
      %p147 = scmp.eq.s32.totalorder %s25, 1
      %p148 = por %p146, %p147
      %p149 = scmp.ne.s32.totalorder %s140, %s141
      %p150 = scmp.eq.s32.totalorder %s25, 0
      %p151 = por %p149, %p150
      %p152 = scmp.ne.s32.totalorder %s140, %s141
      %p153 = scmp.eq.s32.totalorder %s26, 1
      %p154 = por %p152, %p153
      %p156 = scmp.ne.s32.totalorder %s141, %s155
      %p157 = scmp.eq.s32.totalorder %s26, 0
      %p158 = por %p156, %p157
      %s160 = sadd.s32 %s159, 1
      %p163 = scmp.eq.s32.totalorder %s20, 1
      %p164 = scmp.ne.s32.totalorder %s159, %s161
      %p165 = scmp.eq.s32.totalorder %s20, 0
      %p166 = por %p164, %p165
      %p167 = scmp.ne.s32.totalorder %s159, %s161
      %p168 = scmp.eq.s32.totalorder %s25, 1
      %p169 = por %p167, %p168
      %p170 = scmp.ne.s32.totalorder %s161, %s162
      %p171 = scmp.eq.s32.totalorder %s25, 0
      %p172 = por %p170, %p171
      %p173 = scmp.ne.s32.totalorder %s161, %s162
      %p174 = scmp.eq.s32.totalorder %s26, 1
      %p175 = por %p173, %p174
      %p177 = scmp.ne.s32.totalorder %s162, %s176
      %p178 = scmp.eq.s32.totalorder %s26, 0
      %p179 = por %p177, %p178
      %s181 = sadd.s32 %s180, 1
      %p184 = scmp.eq.s32.totalorder %s20, 1
      %p185 = scmp.ne.s32.totalorder %s180, %s182
      %p186 = scmp.eq.s32.totalorder %s20, 0
      %p187 = por %p185, %p186
      %p188 = scmp.ne.s32.totalorder %s180, %s182
      %p189 = scmp.eq.s32.totalorder %s25, 1
      %p190 = por %p188, %p189
      %p191 = scmp.ne.s32.totalorder %s182, %s183
      %p192 = scmp.eq.s32.totalorder %s25, 0
      %p193 = por %p191, %p192
      %p194 = scmp.ne.s32.totalorder %s182, %s183
      %p195 = scmp.eq.s32.totalorder %s26, 1
      %p196 = por %p194, %p195
      %p198 = scmp.ne.s32.totalorder %s183, %s197
      %p199 = scmp.eq.s32.totalorder %s26, 0
      %p200 = por %p198, %p199
      %s202 = sadd.s32 %s201, 1
      %p205 = scmp.eq.s32.totalorder %s20, 1
      %p206 = scmp.ne.s32.totalorder %s201, %s203
      %p207 = scmp.eq.s32.totalorder %s20, 0
      %p208 = por %p206, %p207
      %p209 = scmp.ne.s32.totalorder %s201, %s203
      %p210 = scmp.eq.s32.totalorder %s25, 1
      %p211 = por %p209, %p210
      %p212 = scmp.ne.s32.totalorder %s203, %s204
      %p213 = scmp.eq.s32.totalorder %s25, 0
      %p214 = por %p212, %p213
      %p215 = scmp.ne.s32.totalorder %s203, %s204
      %p216 = scmp.eq.s32.totalorder %s26, 1
      %p217 = por %p215, %p216
      %p219 = scmp.ne.s32.totalorder %s204, %s218
      %p220 = scmp.eq.s32.totalorder %s26, 0
      %p221 = por %p219, %p220
      %s222 = ssub.s32 %s20, %s27
      %p223 = scmp.eq.s32.totalorder %s222, 0
      %s225 = sadd.s32 %s224, 1
      %s226 = scalar_select %p223, %s224, %s225
      %p229 = pneg %p223
      %p230 = scmp.eq.s32.totalorder %s20, 1
      %p231 = por %p229, %p230
      %p232 = scmp.ne.s32.totalorder %s224, %s227
      %p233 = scmp.eq.s32.totalorder %s20, 0
      %p234 = por %p232, %p233
      %p235 = scmp.ne.s32.totalorder %s224, %s227
      %p236 = scmp.eq.s32.totalorder %s25, 1
      %p237 = por %p235, %p236
      %p238 = scmp.ne.s32.totalorder %s227, %s228
      %p239 = scmp.eq.s32.totalorder %s25, 0
      %p240 = por %p238, %p239
      %p241 = scmp.ne.s32.totalorder %s227, %s228
      %p242 = scmp.eq.s32.totalorder %s26, 1
      %p243 = por %p241, %p242
      %p245 = scmp.ne.s32.totalorder %s228, %s244
      %p246 = scmp.eq.s32.totalorder %s26, 0
      %p247 = por %p245, %p246
      %p248 = scmp.le.s32.totalorder 1, %s20
      %p249 = scmp.lt.s32.totalorder %s20, 3
      %p250 = pnand %p248, %p249
      %p251 = pneg %p250
      // Predicated region
      $region9: #{critic_forward.1} parent=5 // pred_check
        _
      $region10: #{critic_forward.1} parent=5 // pred_check_branch
        %253 = sbr.rel (%p250) target = $region12
      $region11: #{critic_forward.1} parent=5 // pred_region
        %s254 = ssub.s32 %s20, 1
        // Predicated region
        $region13: #{critic_forward.1} parent=11 // pred_check
          %p255 = pneg %p67
        $region14: #{critic_forward.1} parent=11 // pred_check_branch
          %257 = sbr.rel (%p255) target = $region16
        $region15: #{critic_forward.1} parent=11 // pred_region
          _
        $region16: #{critic_forward.1} parent=11 // pred_fallthru
          _
        // Predicated region
        $region17: #{critic_forward.1} parent=11 // pred_check
          %p258 = pneg %p88
        $region18: #{critic_forward.1} parent=11 // pred_check_branch
          %260 = sbr.rel (%p258) target = $region20
        $region19: #{critic_forward.1} parent=11 // pred_region
          _
        $region20: #{critic_forward.1} parent=11 // pred_fallthru
          _
        // Predicated region
        $region21: #{critic_forward.1} parent=11 // pred_check
          %p261 = pneg %p109
        $region22: #{critic_forward.1} parent=11 // pred_check_branch
          %263 = sbr.rel (%p261) target = $region24
        $region23: #{critic_forward.1} parent=11 // pred_region
          _
        $region24: #{critic_forward.1} parent=11 // pred_fallthru
          _
        // Predicated region
        $region25: #{critic_forward.1} parent=11 // pred_check
          %p264 = pneg %p130
        $region26: #{critic_forward.1} parent=11 // pred_check_branch
          %266 = sbr.rel (%p264) target = $region28
        $region27: #{critic_forward.1} parent=11 // pred_region
          _
        $region28: #{critic_forward.1} parent=11 // pred_fallthru
          _
        // Predicated region
        $region29: #{critic_forward.1} parent=11 // pred_check
          %p267 = pneg %p151
        $region30: #{critic_forward.1} parent=11 // pred_check_branch
          %269 = sbr.rel (%p267) target = $region32
        $region31: #{critic_forward.1} parent=11 // pred_region
          _
        $region32: #{critic_forward.1} parent=11 // pred_fallthru
          _
        // Predicated region
        $region33: #{critic_forward.1} parent=11 // pred_check
          %p270 = pneg %p172
        $region34: #{critic_forward.1} parent=11 // pred_check_branch
          %272 = sbr.rel (%p270) target = $region36
        $region35: #{critic_forward.1} parent=11 // pred_region
          _
        $region36: #{critic_forward.1} parent=11 // pred_fallthru
          _
        // Predicated region
        $region37: #{critic_forward.1} parent=11 // pred_check
          %p273 = pneg %p193
        $region38: #{critic_forward.1} parent=11 // pred_check_branch
          %275 = sbr.rel (%p273) target = $region40
        $region39: #{critic_forward.1} parent=11 // pred_region
          _
        $region40: #{critic_forward.1} parent=11 // pred_fallthru
          _
        // Predicated region
        $region41: #{critic_forward.1} parent=11 // pred_check
          %p276 = pneg %p214
        $region42: #{critic_forward.1} parent=11 // pred_check_branch
          %278 = sbr.rel (%p276) target = $region44
        $region43: #{critic_forward.1} parent=11 // pred_region
          _
        $region44: #{critic_forward.1} parent=11 // pred_fallthru
          _
      $region12: #{critic_forward.1} parent=5 // pred_fallthru
        _
      %p279 = scmp.lt.s32.totalorder %s20, 2
      // Predicated region
      $region45: #{critic_forward.1} parent=5 // pred_check
        %p280 = pneg %p279
      $region46: #{critic_forward.1} parent=5 // pred_check_branch
        %282 = sbr.rel (%p280) target = $region48
      $region47: #{critic_forward.1} parent=5 // pred_region
        // Predicated region
        $region49: #{critic_forward.1} parent=47 // pred_check
          %p283 = pneg %p40
        $region50: #{critic_forward.1} parent=47 // pred_check_branch
          %285 = sbr.rel (%p283) target = $region52
        $region51: #{critic_forward.1} parent=47 // pred_region
          %s286 = smul.u32 16, %s20
          %p287 = scmp.lt.s32.totalorder %s286, 31
          %s288 = scalar_select %p287, %s286, 31
          %s289 = smul.addr %s288, 8
          %s290 = scalar_lea.vmem %s0, %s289
          %s291 = smul.u32 16, %s20
        $region52: #{critic_forward.1} parent=47 // pred_fallthru
          _
      $region48: #{critic_forward.1} parent=5 // pred_fallthru
        _
      %p292 = scmp.le.s32.totalorder 1, %s20
      %p293 = scmp.lt.s32.totalorder %s20, 3
      %p294 = pnand %p292, %p293
      %p295 = pneg %p294
      // Predicated region
      $region53: #{critic_forward.1} parent=5 // pred_check
        _
      $region54: #{critic_forward.1} parent=5 // pred_check_branch
        %297 = sbr.rel (%p294) target = $region56
      $region55: #{critic_forward.1} parent=5 // pred_region
        %s298 = ssub.s32 %s20, 1
        %s299 = smul.u32 16, %s25
        %p300 = scmp.lt.s32.totalorder %s299, 31
        %s301 = scalar_select %p300, %s299, 31
        %s302 = smul.addr %s301, 8
        %s303 = scalar_lea.vmem %s0, %s302
        %p304 = pneg %p46
        %p305 = pneg %p43
        %p306 = pneg %p67
        %p307 = pneg %p64
        %p308 = pneg %p88
        %p309 = pneg %p85
        %p310 = pneg %p109
        %p311 = pneg %p106
        %p312 = pneg %p130
        %p313 = pneg %p127
        %p314 = pneg %p151
        %p315 = pneg %p148
        %p316 = pneg %p172
        %p317 = pneg %p169
        %p318 = pneg %p193
        %p319 = pneg %p190
        %p320 = pneg %p214
        %p321 = pneg %p211
        %p322 = pneg %p240
        %p323 = pneg %p237
        %s324 = sand.u32 %s227, 1
        %s325 = scalar_lea.sflag [#allocation4], %s324
        %s326 = sand.u32 %s227, 1
        %s327 = scalar_lea.vmem [#allocation3], %s326
        %s328 = smul.u32 16, %s25
        %p329 = scmp.lt.s32.totalorder %s328, 31
        %s330 = scalar_select %p329, %s328, 31
        %s331 = smul.addr %s330, 8
        %s332 = scalar_lea.vmem %s0, %s331
        %s333 = smul.u32 16, %s25
        %v335 = vld [vmem:[%s332] sm:$0xff]
        %v336 = vld [vmem:[%s332 + $0x8] sm:$0xff]
        %v337 = vld [vmem:[%s332 + $0x10] sm:$0xff]
        %v338 = vld [vmem:[%s332 + $0x18] sm:$0xff]
        %v339 = vld [vmem:[%s332 + $0x20] sm:$0xff]
        %v340 = vld [vmem:[%s332 + $0x28] sm:$0xff]
        %v341 = vld [vmem:[%s332 + $0x30] sm:$0xff]
        %v342 = vld [vmem:[%s332 + $0x38] sm:$0xff]
        %v343 = vld [vmem:[%s332 + $0x40] sm:$0xff]
        %v344 = vld [vmem:[%s332 + $0x48] sm:$0xff]
        %v345 = vld [vmem:[%s332 + $0x50] sm:$0xff]
        %v346 = vld [vmem:[%s332 + $0x58] sm:$0xff]
        %v347 = vld [vmem:[%s332 + $0x60] sm:$0xff]
        %v348 = vld [vmem:[%s332 + $0x68] sm:$0xff]
        %v349 = vld [vmem:[%s332 + $0x70] sm:$0xff]
        %v350 = vld [vmem:[%s332 + $0x78] sm:$0xff]
        %v351 = vpack.c.bf16 %v336, %v335
        %v352 = vpack.c.bf16 %v338, %v337
        %v353 = vpack.c.bf16 %v340, %v339
        %v354 = vpack.c.bf16 %v342, %v341
        %v355 = vpack.c.bf16 %v344, %v343
        %v356 = vpack.c.bf16 %v346, %v345
        %v357 = vpack.c.bf16 %v348, %v347
        %v358 = vpack.c.bf16 %v350, %v349
        %v359 = vld [vmem:[%s1] sm:$0xf]
        %v360 = vld [vmem:[%s1 + $0x4] sm:$0xf]
        %v361 = vld [vmem:[%s1 + $0x8] sm:$0xf]
        %v362 = vld [vmem:[%s1 + $0xc] sm:$0xf]
        %v363 = vld [vmem:[%s2] sm:$0xff]
        %v364 = vld [vmem:[%s2 + $0x8] sm:$0xff]
        %v365 = vld [vmem:[%s2 + $0x10] sm:$0xff]
        %v366 = vld [vmem:[%s2 + $0x18] sm:$0xff]
        %368 = vset.pattern.permute.xlu0 0
        %369 = vperm.xlu0 %368, %v363
        %v370 = vpop.permute.xlu0 %369
        %373 = vset.pattern.permute.xlu0 0
        %374 = vperm.xlu0 %373, %v364
        %v375 = vpop.permute.xlu0 %374
        %378 = vset.pattern.permute.xlu0 0
        %379 = vperm.xlu0 %378, %v365
        %v380 = vpop.permute.xlu0 %379
        %383 = vset.pattern.permute.xlu0 0
        %384 = vperm.xlu0 %383, %v366
        %v385 = vpop.permute.xlu0 %384
        %v391 = vunpack.c.l.b16 %v359
        %v392 = vunpack.c.l.b16 %v360
        %v393 = vunpack.c.l.b16 %v361
        %v394 = vunpack.c.l.b16 %v362
        %v395 = vpack.c.b16 %v392, %v391
        %v396 = vpack.c.b16 %v394, %v393
        %vm397 = vcmask 130048
        %v399 = vsel %vm397, %v395, 0
        %v402 = vsel %vm397, %v396, 0
        %v405 = vsel %vm397, %v351, 0
        %v408 = vsel %vm397, %v352, 0
        %v411 = vsel %vm397, %v353, 0
        %v414 = vsel %vm397, %v354, 0
        %v417 = vsel %vm397, %v355, 0
        %v420 = vsel %vm397, %v356, 0
        %v423 = vsel %vm397, %v357, 0
        %v426 = vsel %vm397, %v358, 0
        %428 = vmatpush.bf16.xpose.msra.mxu0 %v426
        %429 = vmatpush.bf16.xpose.msra.mxu0 %v423
        %430 = vmatpush.bf16.xpose.msra.mxu0 %v420
        %431 = vmatpush.bf16.xpose.msra.mxu0 %v417
        %432 = vmatpush.bf16.xpose.msra.mxu0 %v414
        %433 = vmatpush.bf16.xpose.msra.mxu0 %v411
        %434 = vmatpush.bf16.xpose.msra.mxu0 %v408
        %435 = vmatpush.bf16.xpose.msra.mxu0 %v405
        %436 = vmatmul.bf16.gmra.mxu0 %v399
        %v437 = vpop.f32.mrf.mxu0
        %v438 = vadd.f32 %v370, %v437
        %v439 = vpop.f32.mrf.mxu0
        %v440 = vadd.f32 %v375, %v439
        %441 = vmatmul.bf16.gmra.mxu0 %v402
        %v442 = vpop.f32.mrf.mxu0
        %v443 = vadd.f32 %v380, %v442
        %v444 = vpop.f32.mrf.mxu0
        %v445 = vadd.f32 %v385, %v444
        %446 = vdwg.mxu0
        %v447 = vmax.f32 %v438, 0.0
        %v448 = vmax.f32 %v440, 0.0
        %v449 = vmax.f32 %v443, 0.0
        %v450 = vmax.f32 %v445, 0.0
        %v451 = vld [vmem:[%s3] sm:$0xf]
        %v452 = vld [vmem:[%s3 + $0x4] sm:$0xf]
        %v453 = vld [vmem:[%s3 + $0x8] sm:$0xf]
        %v454 = vld [vmem:[%s3 + $0xc] sm:$0xf]
        %v455 = vld [vmem:[%s3 + $0x10] sm:$0xf]
        %v456 = vld [vmem:[%s3 + $0x14] sm:$0xf]
        %v457 = vld [vmem:[%s3 + $0x18] sm:$0xf]
        %v458 = vld [vmem:[%s3 + $0x1c] sm:$0xf]
        %v459 = vpack.c.bf16 %v448, %v447
        %v460 = vpack.c.bf16 %v450, %v449
        %v461 = vld [vmem:[%s4] sm:$0xff]
        %v462 = vld [vmem:[%s4 + $0x8] sm:$0xff]
        %v463 = vld [vmem:[%s4 + $0x10] sm:$0xff]
        %v464 = vld [vmem:[%s4 + $0x18] sm:$0xff]
        %v465 = vld [vmem:[%s4 + $0x20] sm:$0xff]
        %v466 = vld [vmem:[%s4 + $0x28] sm:$0xff]
        %v467 = vld [vmem:[%s4 + $0x30] sm:$0xff]
        %v468 = vld [vmem:[%s4 + $0x38] sm:$0xff]
        %470 = vset.pattern.permute.xlu0 0
        %471 = vperm.xlu0 %470, %v461
        %v472 = vpop.permute.xlu0 %471
        %475 = vset.pattern.permute.xlu0 0
        %476 = vperm.xlu0 %475, %v462
        %v477 = vpop.permute.xlu0 %476
        %480 = vset.pattern.permute.xlu0 0
        %481 = vperm.xlu0 %480, %v463
        %v482 = vpop.permute.xlu0 %481
        %485 = vset.pattern.permute.xlu0 0
        %486 = vperm.xlu0 %485, %v464
        %v487 = vpop.permute.xlu0 %486
        %490 = vset.pattern.permute.xlu0 0
        %491 = vperm.xlu0 %490, %v465
        %v492 = vpop.permute.xlu0 %491
        %495 = vset.pattern.permute.xlu0 0
        %496 = vperm.xlu0 %495, %v466
        %v497 = vpop.permute.xlu0 %496
        %500 = vset.pattern.permute.xlu0 0
        %501 = vperm.xlu0 %500, %v467
        %v502 = vpop.permute.xlu0 %501
        %505 = vset.pattern.permute.xlu0 0
        %506 = vperm.xlu0 %505, %v468
        %v507 = vpop.permute.xlu0 %506
        %v517 = vunpack.c.l.b16 %v451
        %v518 = vunpack.c.l.b16 %v452
        %v519 = vunpack.c.l.b16 %v453
        %v520 = vunpack.c.l.b16 %v454
        %v521 = vunpack.c.l.b16 %v455
        %v522 = vunpack.c.l.b16 %v456
        %v523 = vunpack.c.l.b16 %v457
        %v524 = vunpack.c.l.b16 %v458
        %v525 = vpack.c.b16 %v518, %v517
        %v526 = vpack.c.b16 %v520, %v519
        %v527 = vpack.c.b16 %v522, %v521
        %v528 = vpack.c.b16 %v524, %v523
        %vm529 = vcmask 261120
        %v531 = vsel %vm529, %v525, 0
        %v534 = vsel %vm529, %v526, 0
        %v537 = vsel %vm529, %v527, 0
        %v540 = vsel %vm529, %v528, 0
        %542 = vmatpush.bf16.msra.mxu0 0
        %543 = vmatpush.bf16.msra.mxu0 0
        %544 = vmatpush.bf16.msra.mxu0 0
        %545 = vmatpush.bf16.msra.mxu0 0
        %546 = vmatpush.bf16.msra.mxu0 0
        %547 = vmatpush.bf16.msra.mxu0 0
        %548 = vmatpush.bf16.msra.mxu0 %v460
        %549 = vmatpush.bf16.msra.mxu0 %v459
        %550 = vmatmul.bf16.gmra.mxu0 %v531
        %v551 = vpop.f32.mrf.mxu0
        %v552 = vadd.f32 %v472, %v551
        %v553 = vpop.f32.mrf.mxu0
        %v554 = vadd.f32 %v477, %v553
        %555 = vmatmul.bf16.gmra.mxu0 %v534
        %v556 = vpop.f32.mrf.mxu0
        %v557 = vadd.f32 %v482, %v556
        %v558 = vpop.f32.mrf.mxu0
        %v559 = vadd.f32 %v487, %v558
        %560 = vmatmul.bf16.gmra.mxu0 %v537
        %v561 = vpop.f32.mrf.mxu0
        %v562 = vadd.f32 %v492, %v561
        %v563 = vpop.f32.mrf.mxu0
        %v564 = vadd.f32 %v497, %v563
        %565 = vmatmul.bf16.gmra.mxu0 %v540
        %v566 = vpop.f32.mrf.mxu0
        %v567 = vadd.f32 %v502, %v566
        %v568 = vpop.f32.mrf.mxu0
        %v569 = vadd.f32 %v507, %v568
        %570 = vdwg.mxu0
        %v571 = vmax.f32 %v552, 0.0
        %v572 = vmax.f32 %v554, 0.0
        %v573 = vmax.f32 %v557, 0.0
        %v574 = vmax.f32 %v559, 0.0
        %v575 = vmax.f32 %v562, 0.0
        %v576 = vmax.f32 %v564, 0.0
        %v577 = vmax.f32 %v567, 0.0
        %v578 = vmax.f32 %v569, 0.0
        %v579 = vld [vmem:[%s5] sm:$0xf]
        %v580 = vld [vmem:[%s5 + $0x4] sm:$0xf]
        %v581 = vld [vmem:[%s5 + $0x8] sm:$0xf]
        %v582 = vld [vmem:[%s5 + $0xc] sm:$0xf]
        %v583 = vpack.c.bf16 %v572, %v571
        %v584 = vpack.c.bf16 %v574, %v573
        %v585 = vpack.c.bf16 %v576, %v575
        %v586 = vpack.c.bf16 %v578, %v577
        %v587 = vld [vmem:[%s6] sm:$0xff]
        %v588 = vld [vmem:[%s6 + $0x8] sm:$0xff]
        %v589 = vld [vmem:[%s6 + $0x10] sm:$0xff]
        %v590 = vld [vmem:[%s6 + $0x18] sm:$0xff]
        %592 = vset.pattern.permute.xlu0 0
        %593 = vperm.xlu0 %592, %v587
        %v594 = vpop.permute.xlu0 %593
        %597 = vset.pattern.permute.xlu0 0
        %598 = vperm.xlu0 %597, %v588
        %v599 = vpop.permute.xlu0 %598
        %602 = vset.pattern.permute.xlu0 0
        %603 = vperm.xlu0 %602, %v589
        %v604 = vpop.permute.xlu0 %603
        %607 = vset.pattern.permute.xlu0 0
        %608 = vperm.xlu0 %607, %v590
        %v609 = vpop.permute.xlu0 %608
        %v615 = vunpack.c.l.b16 %v579
        %v616 = vunpack.c.l.b16 %v580
        %v617 = vunpack.c.l.b16 %v581
        %v618 = vunpack.c.l.b16 %v582
        %v619 = vpack.c.b16 %v616, %v615
        %v620 = vpack.c.b16 %v618, %v617
        %vm621 = vcmask 523264
        %v623 = vsel %vm621, %v619, 0
        %v626 = vsel %vm621, %v620, 0
        %628 = vmatpush.bf16.msra.mxu0 0
        %629 = vmatpush.bf16.msra.mxu0 0
        %630 = vmatpush.bf16.msra.mxu0 0
        %631 = vmatpush.bf16.msra.mxu0 0
        %632 = vmatpush.bf16.msra.mxu0 %v586
        %633 = vmatpush.bf16.msra.mxu0 %v585
        %634 = vmatpush.bf16.msra.mxu0 %v584
        %635 = vmatpush.bf16.msra.mxu0 %v583
        %636 = vmatmul.bf16.gmra.mxu0 %v623
        %v637 = vpop.f32.mrf.mxu0
        %v638 = vadd.f32 %v594, %v637
        %v639 = vpop.f32.mrf.mxu0
        %v640 = vadd.f32 %v599, %v639
        %641 = vmatmul.bf16.gmra.mxu0 %v626
        %v642 = vpop.f32.mrf.mxu0
        %v643 = vadd.f32 %v604, %v642
        %v644 = vpop.f32.mrf.mxu0
        %v645 = vadd.f32 %v609, %v644
        %646 = vdwg.mxu0
        %v647 = vmax.f32 %v638, 0.0
        %v648 = vmax.f32 %v640, 0.0
        %v649 = vmax.f32 %v643, 0.0
        %v650 = vmax.f32 %v645, 0.0
        %v651 = vld [vmem:[%s7] sm:$0x1]
        %v652 = vpack.c.bf16 %v648, %v647
        %v653 = vpack.c.bf16 %v650, %v649
        %v654 = vld [vmem:[#allocation2] sm:$0x1]
        %656 = vset.pattern.permute.xlu0 0
        %657 = vperm.xlu0 %656, %v654
        %v658 = vpop.permute.xlu0 %657
        %v660 = vperm.slane %v658, 0
        %v662 = vsel %vm529, %v651, 0
        %664 = vmatpush.bf16.msra.mxu0 0
        %665 = vmatpush.bf16.msra.mxu0 0
        %666 = vmatpush.bf16.msra.mxu0 0
        %667 = vmatpush.bf16.msra.mxu0 0
        %668 = vmatpush.bf16.msra.mxu0 0
        %669 = vmatpush.bf16.msra.mxu0 0
        %670 = vmatpush.bf16.msra.mxu0 %v653
        %671 = vmatpush.bf16.msra.mxu0 %v652
        %672 = vmatmul.bf16.gmra.mxu0 %v662
        %v673 = vpop.f32.mrf.mxu0
        %v674 = vadd.f32 %v660, %v673
        %v675 = vpop.f32.mrf.mxu0
        %676 = vdwg.mxu0
        %677 = vst [vmem:[%s327] sm:$0x1] %v674
        %s678 = sand.u32 %s227, 1
        %s679 = scalar_lea.sflag [#allocation4], %s678
        %s680 = sand.u32 %s227, 1
        %s681 = scalar_lea.vmem [#allocation3], %s680
        // Predicated region
        $region57: #{critic_forward.1} parent=55 // pred_check
          %p682 = pneg %p237
        $region58: #{critic_forward.1} parent=55 // pred_check_branch
          %684 = sbr.rel (%p682) target = $region60
        $region59: #{critic_forward.1} parent=55 // pred_region
          %686 = vsyncadd %s679, 0
          %s687 = scalar_lea.hbm %s9, %s25
          %s689 = sshll.u32 %s681, 4
          %s690 = int_to_ptr.vmem [resolvable:$true] %s689
          %s691 = sshll.u32 %s687, 4
          %s692 = int_to_ptr.hbm [resolvable:$true] %s691
          %694 = dma.vmem_to_hbm [thread:$0]  %s690, 16, %s692, %s679
        $region60: #{critic_forward.1} parent=55 // pred_fallthru
          _
      $region56: #{critic_forward.1} parent=5 // pred_fallthru
        _
      %p695 = scmp.le.s32.totalorder 2, %s20
      // Predicated region
      $region61: #{critic_forward.1} parent=5 // pred_check
        %p696 = pneg %p695
      $region62: #{critic_forward.1} parent=5 // pred_check_branch
        %698 = sbr.rel (%p696) target = $region64
      $region63: #{critic_forward.1} parent=5 // pred_region
        %s699 = ssub.s32 %s20, 2
        // Predicated region
        $region65: #{critic_forward.1} parent=63 // pred_check
          %p700 = pneg %p243
        $region66: #{critic_forward.1} parent=63 // pred_check_branch
          %702 = sbr.rel (%p700) target = $region68
        $region67: #{critic_forward.1} parent=63 // pred_region
          %s703 = sand.u32 %s228, 1
          %s704 = scalar_lea.sflag [#allocation4], %s703
          %s705 = sand.u32 %s228, 1
          %s706 = scalar_lea.vmem [#allocation3], %s705
          %708 = dma.done %s704, 16
        $region68: #{critic_forward.1} parent=63 // pred_fallthru
          _
      $region64: #{critic_forward.1} parent=5 // pred_fallthru
        _
    $region6: #{critic_forward.1} parent=1 // loop_footer
      %s24 = sadd.s32 1, %s20
    $region7: #{critic_forward.1} parent=1 // loop_footer_branch
      %19 = sbr.rel target = $region3
    $region8: #{critic_forward.1} parent=1 // loop_exit
      _
    %709 = vsyncpa [#allocation4], 1
    %s710 = scalar_lea.sflag [#allocation4], 1
    %711 = vsyncpa %s710, 1

</llo_original>
